<compile_context>
chip_gen: v7x
topology: tpu7x:2x2x1
jax: 0.10.0
libtpu: 0.0.40
codegen_flags: <defaults>
</compile_context>

<pallas_src>
import jax
import jax.numpy as jnp
from jax import lax
from jax.experimental import pallas as pl
from jax.experimental.pallas import tpu as pltpu


# ---------------------------------------------------------------------------
# Parameter packing: one lane-dense [PACK_ROWS, 128] f32 slab per encoder.
# Every sub-block starts on an 8-row (sublane-tile) boundary; all padding is
# zero so the padded lanes/rows contribute exactly nothing to the math.
# ---------------------------------------------------------------------------
H1, H2, H3 = 128, 64, 8          # hidden sizes of the 3 Linear layers
LANES = 128

ROW_W1 = 0                        # w1:  row 0,                  cols 0:128
ROW_B1 = 1                        # b1:  row 1,                  cols 0:128
ROW_W2 = 8                        # w2:  rows 8:136   (128 rows), cols 0:64
ROW_B2 = ROW_W2 + H1              # b2:  row 136,                cols 0:64
ROW_W3 = 144                      # w3:  rows 144:272 (128 rows), real data in
                                  #      rows 144:208, cols 0:8 (rest zero)
ROW_B3 = ROW_W3 + LANES           # b3:  row 272,                cols 0:8
PACK_ROWS = 280                   # multiple of 8


def _round_up(x, m):
    return (x + m - 1) // m * m


def pack_encoder_params(w1, b1, w2, b2, w3, b3):
    """w* stored as [in, out] (PyTorch W.T); b* as [out] or [1, out]."""
    pack = jnp.zeros((PACK_ROWS, LANES), jnp.float32)
    pack = pack.at[ROW_W1, :H1].set(jnp.asarray(w1, jnp.float32).reshape(H1))
    pack = pack.at[ROW_B1, :H1].set(jnp.asarray(b1, jnp.float32).reshape(H1))
    pack = pack.at[ROW_W2:ROW_W2 + H1, :H2].set(jnp.asarray(w2, jnp.float32))
    pack = pack.at[ROW_B2, :H2].set(jnp.asarray(b2, jnp.float32).reshape(H2))
    pack = pack.at[ROW_W3:ROW_W3 + H2, :H3].set(jnp.asarray(w3, jnp.float32))
    pack = pack.at[ROW_B3, :H3].set(jnp.asarray(b3, jnp.float32).reshape(H3))
    return pack


# ---------------------------------------------------------------------------
# Kernel: one (tm, tn) output tile per grid step.
# ---------------------------------------------------------------------------
def _critic_kernel(x1_ref, x2_ref, p1_ref, p2_ref, out_ref):
    def encode(x_ref, p_ref):
        x = x_ref[...]                               # [T, 1] f32
        w1 = p_ref[ROW_W1:ROW_W1 + 1, :]             # [1, 128]
        b1 = p_ref[ROW_B1:ROW_B1 + 1, :]             # [1, 128]
        w2 = p_ref[ROW_W2:ROW_W2 + H1, :]            # [128, 128] (cols >=64 zero)
        b2 = p_ref[ROW_B2:ROW_B2 + 1, :]             # [1, 128]   (cols >=64 zero)
        w3 = p_ref[ROW_W3:ROW_W3 + LANES, :]         # [128, 128] (rows>=64, cols>=8 zero)
        b3 = p_ref[ROW_B3:ROW_B3 + 1, :]             # [1, 128]   (cols >=8 zero)

        # Layer 1: K=1 contraction == broadcast multiply -> pure VPU, no MXU.
        h = jnp.maximum(x * w1 + b1, 0.0)            # [T, 128] f32

        # Layer 2: K=128 MXU matmul in bf16, f32 accumulation; bias/ReLU in f32.
        h = jnp.dot(h.astype(jnp.bfloat16), w2.astype(jnp.bfloat16),
                    preferred_element_type=jnp.float32) + b2
        h = jnp.maximum(h, 0.0)                      # [T, 128], cols >=64 exactly 0

        # Layer 3: padded to 128 lanes; cols >=8 of the result are exactly 0.
        e = jnp.dot(h.astype(jnp.bfloat16), w3.astype(jnp.bfloat16),
                    preferred_element_type=jnp.float32) + b3
        return e                                     # [T, 128]

    e1 = encode(x1_ref, p1_ref)                      # [tm, 128]
    e2 = encode(x2_ref, p2_ref)                      # [tn, 128]

    # scores = e1 @ e2.T with the transpose folded into the contraction
    # (dimension_numbers contracts axis 1 of both operands -> single MXU op).
    # Padded columns (8:128) are exactly zero in both, so they add nothing.
    out_ref[...] = lax.dot_general(
        e1.astype(jnp.bfloat16), e2.astype(jnp.bfloat16),
        dimension_numbers=(((1,), (1,)), ((), ())),
        preferred_element_type=jnp.float32).astype(out_ref.dtype)


# ---------------------------------------------------------------------------
# Wrapper: pads inputs to tile multiples, builds the 2-D grid, slices output.
# ---------------------------------------------------------------------------
def test_critic_forward(thing1, thing2, params, *, tm=512, tn=512,
                        vmem_limit_bytes=None):
    """params: dict with e{1,2}_{w,b}{1,2,3}; weights as [in, out] (PyTorch W.T).

    tm / tn: output tile sizes. tm rounds to a multiple of 8, tn to a multiple
    of 128 (lane-dense output). Keep tm*tn*4B (double-buffered) well under the
    scoped VMEM limit — <=1024x1024 is safe on v7x; larger tiles on v5e/v6e may
    need vmem_limit_bytes (e.g. 64 << 20).
    """
    thing1 = jnp.asarray(thing1, jnp.float32).reshape(-1, 1)
    thing2 = jnp.asarray(thing2, jnp.float32).reshape(-1, 1)
    n1, n2 = thing1.shape[0], thing2.shape[0]

    tm = _round_up(min(tm, _round_up(n1, 8)), 8)
    tn = _round_up(min(tn, _round_up(n2, 128)), 128)
    n1p = _round_up(n1, tm)
    n2p = _round_up(n2, tn)

    x1 = jnp.zeros((n1p, 1), jnp.float32).at[:n1].set(thing1)
    x2 = jnp.zeros((n2p, 1), jnp.float32).at[:n2].set(thing2)

    pack1 = pack_encoder_params(params["e1_w1"], params["e1_b1"],
                                params["e1_w2"], params["e1_b2"],
                                params["e1_w3"], params["e1_b3"])
    pack2 = pack_encoder_params(params["e2_w1"], params["e2_b1"],
                                params["e2_w2"], params["e2_b2"],
                                params["e2_w3"], params["e2_b3"])

    grid = (n1p // tm, n2p // tn)

    out = pl.pallas_call(
        _critic_kernel,
        grid=grid,
        in_specs=[
            pl.BlockSpec((tm, 1), lambda i, j: (i, 0)),            # thing1 tile
            pl.BlockSpec((tn, 1), lambda i, j: (j, 0)),            # thing2 tile
            pl.BlockSpec((PACK_ROWS, LANES), lambda i, j: (0, 0)),  # enc1 params
            pl.BlockSpec((PACK_ROWS, LANES), lambda i, j: (0, 0)),  # enc2 params
        ],
        out_specs=pl.BlockSpec((tm, tn), lambda i, j: (i, j)),
        out_shape=jax.ShapeDtypeStruct((n1p, n2p), jnp.float32),
        compiler_params=pltpu.CompilerParams(
            dimension_semantics=("parallel", "parallel"),
            vmem_limit_bytes=vmem_limit_bytes,
        ),
    )(x1, x2, pack1, pack2)

    return out[:n1, :n2]


# ---------------------------------------------------------------------------
# Deterministic init mimicking PyTorch nn.Linear default:
# U(-1/sqrt(fan_in), 1/sqrt(fan_in)); weights stored as [in, out].
# ---------------------------------------------------------------------------
def init_params(key):
    dims = [(1, 128), (128, 64), (64, 8)]
    params = {}
    for enc in ("e1", "e2"):
        for li, (fin, fout) in enumerate(dims, start=1):
            key, kw, kb = jax.random.split(key, 3)
            bound = 1.0 / (fin ** 0.5)
            params[f"{enc}_w{li}"] = jax.random.uniform(
                kw, (fin, fout), jnp.float32, -bound, bound)
            params[f"{enc}_b{li}"] = jax.random.uniform(
                kb, (fout,), jnp.float32, -bound, bound)
    return params


if __name__ == "__main__":
    key = jax.random.PRNGKey(0)
    key, k1, k2, kp = jax.random.split(key, 4)

    # Small shapes, but enough to exercise a multi-tile grid + padding
    # (N2=320 pads to 384 with tn=128; grid = (3, 3)).
    N1, N2 = 192, 320
    thing1 = jax.random.normal(k1, (N1, 1), jnp.float32)
    thing2 = jax.random.normal(k2, (N2, 1), jnp.float32)
    params = init_params(kp)

    scores = test_critic_forward(thing1, thing2, params, tm=64, tn=128)
    scores = jax.block_until_ready(scores)

    # Pure-JAX f32 reference (same math, outside Pallas). Tolerance accounts
    # for the in-kernel bf16 MXU matmuls (f32 accumulation).
    def mlp_ref(x, p, enc):
        h = jnp.maximum(x @ p[f"{enc}_w1"] + p[f"{enc}_b1"], 0.0)
        h = jnp.maximum(h @ p[f"{enc}_w2"] + p[f"{enc}_b2"], 0.0)
        return h @ p[f"{enc}_w3"] + p[f"{enc}_b3"]

    ref = mlp_ref(thing1, params, "e1") @ mlp_ref(thing2, params, "e2").T
    assert scores.shape == (N1, N2)
    assert jnp.allclose(scores, ref, atol=1e-1, rtol=1e-1), \
        float(jnp.max(jnp.abs(scores - ref)))

    print("KERNEL_OK")
</pallas_src>

<mosaic_0001>
module attributes {stable_mosaic.version = 11 : i64} {
  func.func @_critic_kernel(%arg0: i32, %arg1: i32, %arg2: memref<64x1xf32, #tpu.memory_space<vmem>>, %arg3: memref<128x1xf32, #tpu.memory_space<vmem>>, %arg4: memref<280x128xf32, #tpu.memory_space<vmem>>, %arg5: memref<280x128xf32, #tpu.memory_space<vmem>>, %arg6: memref<64x128xf32, #tpu.memory_space<vmem>>) attributes {dimension_semantics = [#tpu.dimension_semantics<parallel>, #tpu.dimension_semantics<parallel>], iteration_bounds = array<i64: 3, 3>, scalar_prefetch = 0 : i64, scratch_operands = 0 : i64, tpu.core_type = #tpu.core_type<tc>, window_params = [{transform_indices = @transform_0, window_bounds = array<i64: 64, 1>}, {transform_indices = @transform_1, window_bounds = array<i64: 128, 1>}, {pipeline_mode = #tpu.pipeline_mode<synchronous>, transform_indices = @transform_2, window_bounds = array<i64: 280, 128>}, {pipeline_mode = #tpu.pipeline_mode<synchronous>, transform_indices = @transform_3, window_bounds = array<i64: 280, 128>}, {transform_indices = @transform_4, window_bounds = array<i64: 64, 128>}]} {
    %c0 = arith.constant 0 : index
    %c0_0 = arith.constant 0 : index
    %0 = vector.load %arg2[%c0, %c0_0] : memref<64x1xf32, #tpu.memory_space<vmem>>, vector<64x1xf32>
    %c0_1 = arith.constant 0 : index
    %c0_2 = arith.constant 0 : index
    %1 = vector.load %arg4[%c0_1, %c0_2] : memref<280x128xf32, #tpu.memory_space<vmem>>, vector<1x128xf32>
    %c1 = arith.constant 1 : index
    %c0_3 = arith.constant 0 : index
    %2 = vector.load %arg4[%c1, %c0_3] : memref<280x128xf32, #tpu.memory_space<vmem>>, vector<1x128xf32>
    %c8 = arith.constant 8 : index
    %c0_4 = arith.constant 0 : index
    %3 = vector.load %arg4[%c8, %c0_4] : memref<280x128xf32, #tpu.memory_space<vmem>>, vector<128x128xf32>
    %c136 = arith.constant 136 : index
    %c0_5 = arith.constant 0 : index
    %4 = vector.load %arg4[%c136, %c0_5] : memref<280x128xf32, #tpu.memory_space<vmem>>, vector<1x128xf32>
    %c144 = arith.constant 144 : index
    %c0_6 = arith.constant 0 : index
    %5 = vector.load %arg4[%c144, %c0_6] : memref<280x128xf32, #tpu.memory_space<vmem>>, vector<128x128xf32>
    %c272 = arith.constant 272 : index
    %c0_7 = arith.constant 0 : index
    %6 = vector.load %arg4[%c272, %c0_7] : memref<280x128xf32, #tpu.memory_space<vmem>>, vector<1x128xf32>
    %7 = vector.broadcast %0 : vector<64x1xf32> to vector<64x128xf32>
    %8 = vector.broadcast %1 : vector<1x128xf32> to vector<64x128xf32>
    %9 = arith.mulf %7, %8 : vector<64x128xf32>
    %10 = vector.broadcast %2 : vector<1x128xf32> to vector<64x128xf32>
    %11 = arith.addf %9, %10 : vector<64x128xf32>
    %cst = arith.constant 0.000000e+00 : f32
    %12 = vector.broadcast %cst : f32 to vector<64x128xf32>
    %13 = arith.maximumf %11, %12 : vector<64x128xf32>
    %14 = arith.truncf %13 : vector<64x128xf32> to vector<64x128xbf16>
    %15 = arith.truncf %3 : vector<128x128xf32> to vector<128x128xbf16>
    %cst_8 = arith.constant dense<0.000000e+00> : vector<64x128xf32>
    %16 = tpu.matmul %14, %15, %cst_8 {dimension_numbers = #tpu.dot_dimension_numbers<[1], [0], [0], [1], [0, 0, 1, 1], [], []>} : vector<64x128xbf16>, vector<128x128xbf16>, vector<64x128xf32> -> vector<64x128xf32>
    %17 = vector.broadcast %4 : vector<1x128xf32> to vector<64x128xf32>
    %18 = arith.addf %16, %17 : vector<64x128xf32>
    %cst_9 = arith.constant 0.000000e+00 : f32
    %19 = vector.broadcast %cst_9 : f32 to vector<64x128xf32>
    %20 = arith.maximumf %18, %19 : vector<64x128xf32>
    %21 = arith.truncf %20 : vector<64x128xf32> to vector<64x128xbf16>
    %22 = arith.truncf %5 : vector<128x128xf32> to vector<128x128xbf16>
    %cst_10 = arith.constant dense<0.000000e+00> : vector<64x128xf32>
    %23 = tpu.matmul %21, %22, %cst_10 {dimension_numbers = #tpu.dot_dimension_numbers<[1], [0], [0], [1], [0, 0, 1, 1], [], []>} : vector<64x128xbf16>, vector<128x128xbf16>, vector<64x128xf32> -> vector<64x128xf32>
    %24 = vector.broadcast %6 : vector<1x128xf32> to vector<64x128xf32>
    %25 = arith.addf %23, %24 : vector<64x128xf32>
    %c0_11 = arith.constant 0 : index
    %c0_12 = arith.constant 0 : index
    %26 = vector.load %arg3[%c0_11, %c0_12] : memref<128x1xf32, #tpu.memory_space<vmem>>, vector<128x1xf32>
    %c0_13 = arith.constant 0 : index
    %c0_14 = arith.constant 0 : index
    %27 = vector.load %arg5[%c0_13, %c0_14] : memref<280x128xf32, #tpu.memory_space<vmem>>, vector<1x128xf32>
    %c1_15 = arith.constant 1 : index
    %c0_16 = arith.constant 0 : index
    %28 = vector.load %arg5[%c1_15, %c0_16] : memref<280x128xf32, #tpu.memory_space<vmem>>, vector<1x128xf32>
    %c8_17 = arith.constant 8 : index
    %c0_18 = arith.constant 0 : index
    %29 = vector.load %arg5[%c8_17, %c0_18] : memref<280x128xf32, #tpu.memory_space<vmem>>, vector<128x128xf32>
    %c136_19 = arith.constant 136 : index
    %c0_20 = arith.constant 0 : index
    %30 = vector.load %arg5[%c136_19, %c0_20] : memref<280x128xf32, #tpu.memory_space<vmem>>, vector<1x128xf32>
    %c144_21 = arith.constant 144 : index
    %c0_22 = arith.constant 0 : index
    %31 = vector.load %arg5[%c144_21, %c0_22] : memref<280x128xf32, #tpu.memory_space<vmem>>, vector<128x128xf32>
    %c272_23 = arith.constant 272 : index
    %c0_24 = arith.constant 0 : index
    %32 = vector.load %arg5[%c272_23, %c0_24] : memref<280x128xf32, #tpu.memory_space<vmem>>, vector<1x128xf32>
    %33 = vector.broadcast %26 : vector<128x1xf32> to vector<128x128xf32>
    %34 = vector.broadcast %27 : vector<1x128xf32> to vector<128x128xf32>
    %35 = arith.mulf %33, %34 : vector<128x128xf32>
    %36 = vector.broadcast %28 : vector<1x128xf32> to vector<128x128xf32>
    %37 = arith.addf %35, %36 : vector<128x128xf32>
    %cst_25 = arith.constant 0.000000e+00 : f32
    %38 = vector.broadcast %cst_25 : f32 to vector<128x128xf32>
    %39 = arith.maximumf %37, %38 : vector<128x128xf32>
    %40 = arith.truncf %39 : vector<128x128xf32> to vector<128x128xbf16>
    %41 = arith.truncf %29 : vector<128x128xf32> to vector<128x128xbf16>
    %cst_26 = arith.constant dense<0.000000e+00> : vector<128x128xf32>
    %42 = tpu.matmul %40, %41, %cst_26 {dimension_numbers = #tpu.dot_dimension_numbers<[1], [0], [0], [1], [0, 0, 1, 1], [], []>} : vector<128x128xbf16>, vector<128x128xbf16>, vector<128x128xf32> -> vector<128x128xf32>
    %43 = vector.broadcast %30 : vector<1x128xf32> to vector<128x128xf32>
    %44 = arith.addf %42, %43 : vector<128x128xf32>
    %cst_27 = arith.constant 0.000000e+00 : f32
    %45 = vector.broadcast %cst_27 : f32 to vector<128x128xf32>
    %46 = arith.maximumf %44, %45 : vector<128x128xf32>
    %47 = arith.truncf %46 : vector<128x128xf32> to vector<128x128xbf16>
    %48 = arith.truncf %31 : vector<128x128xf32> to vector<128x128xbf16>
    %cst_28 = arith.constant dense<0.000000e+00> : vector<128x128xf32>
    %49 = tpu.matmul %47, %48, %cst_28 {dimension_numbers = #tpu.dot_dimension_numbers<[1], [0], [0], [1], [0, 0, 1, 1], [], []>} : vector<128x128xbf16>, vector<128x128xbf16>, vector<128x128xf32> -> vector<128x128xf32>
    %50 = vector.broadcast %32 : vector<1x128xf32> to vector<128x128xf32>
    %51 = arith.addf %49, %50 : vector<128x128xf32>
    %52 = arith.truncf %25 : vector<64x128xf32> to vector<64x128xbf16>
    %53 = arith.truncf %51 : vector<128x128xf32> to vector<128x128xbf16>
    %cst_29 = arith.constant dense<0.000000e+00> : vector<64x128xf32>
    %54 = tpu.matmul %52, %53, %cst_29 {dimension_numbers = #tpu.dot_dimension_numbers<[1], [1], [0], [0], [0, 0, 1, 0], [], []>} : vector<64x128xbf16>, vector<128x128xbf16>, vector<64x128xf32> -> vector<64x128xf32>
    %c0_30 = arith.constant 0 : index
    %c0_31 = arith.constant 0 : index
    %55 = vector.load %arg6[%c0_30, %c0_31] : memref<64x128xf32, #tpu.memory_space<vmem>>, vector<64x128xf32>
    tpu.vector_store %arg6[%c0_30, %c0_31], %54 {strides = array<i32>} : memref<64x128xf32, #tpu.memory_space<vmem>>, vector<64x128xf32>,
    return
  }
  func.func @transform_0(%arg0: i32, %arg1: i32) -> (i32, i32) {
    %c0_i32 = arith.constant 0 : i32
    %c0_i32_0 = arith.constant 0 : i32
    return %arg0, %c0_i32 : i32, i32
  }
  func.func @transform_1(%arg0: i32, %arg1: i32) -> (i32, i32) {
    %c0_i32 = arith.constant 0 : i32
    %c0_i32_0 = arith.constant 0 : i32
    return %arg1, %c0_i32 : i32, i32
  }
  func.func @transform_2(%arg0: i32, %arg1: i32) -> (i32, i32) {
    %c0_i32 = arith.constant 0 : i32
    %c0_i32_0 = arith.constant 0 : i32
    %c0_i32_1 = arith.constant 0 : i32
    return %c0_i32, %c0_i32_0 : i32, i32
  }
  func.func @transform_3(%arg0: i32, %arg1: i32) -> (i32, i32) {
    %c0_i32 = arith.constant 0 : i32
    %c0_i32_0 = arith.constant 0 : i32
    %c0_i32_1 = arith.constant 0 : i32
    return %c0_i32, %c0_i32_0 : i32, i32
  }
  func.func @transform_4(%arg0: i32, %arg1: i32) -> (i32, i32) {
    %c0_i32 = arith.constant 0 : i32
    return %arg0, %arg1 : i32, i32
  }
}

</mosaic_0001>

<llo_original>
// kernel: tpu_custom_call.1
$region0: #{tpu_custom_call.1}
  #allocation0 [shape = 'u32[]', space=smem, size = 0x4, offset = 0x4, fixed_abs, tag = 'smem constant byte address 0x4 - core index']
  #allocation1 [shape = 'u32[144,128]{1,0:T(1,128)}', space=vmem, size = 0x12000, scoped, tag = 'internal scratch']
  %s0 = inlined_call_operand.vmem [shape: f32[192,1], index: 0, kind: input, shape index: {}]
  %s1 = inlined_call_operand.vmem [shape: f32[384,1], index: 1, kind: input, shape index: {}]
  %s2 = inlined_call_operand.vmem [shape: f32[280,128], index: 2, kind: input, shape index: {}]
  %s3 = inlined_call_operand.vmem [shape: f32[280,128], index: 3, kind: input, shape index: {}]
  %s4 = inlined_call_operand.hbm [shape: f32[192,384], index: 4, kind: output, shape index: {}]
  %s5 = sld [smem:[#allocation0]]
  $region49: #{tpu_custom_call.1} parent=0
    _
  %s7 = ssub.s32 1, %s5
  %s8 = scalar_select 0, %s7, %s5
  $region1: #{tpu_custom_call.1} parent=0
    #allocation2 [shape = 'u8[65536]{0}', space=vmem, size = 0x10000, scoped, tag = 'output window, operand 0']
    #allocation3 [shape = 's32[2]{0}', space=sflag, size = 0x8, scoped, tag = 'scoped memory for tpu_custom_call.1']
    %9 = vsyncpa [#allocation3], 0
    %s10 = scalar_lea.sflag [#allocation3], 1
    %11 = vsyncpa %s10, 0
    loop: start=0, step=1, limit=11
    $region2: #{tpu_custom_call.1} parent=1 // loop_pre_header
      _
    $region3: #{tpu_custom_call.1} parent=1 // loop_header
      %s13 = sphi 0, %s17
      %p14 = scmp.ge.s32.totalorder %s13, 11
      %s20 = sphi 0, %s32
      %s21 = sphi 0, %s28
      %s22 = sphi 0, %s20
      %s23 = sphi 0, %s21
      %s24 = sphi 0, %s22
      %s25 = sphi 0, %s23
      %s35 = sphi 0, %s37
      %s38 = sphi 0, %s35
      %s39 = sphi 0, %s38
      %s55 = sphi 0, %s39
      %s61 = sphi 0, %s63
      %s64 = sphi 0, %s61
      %s65 = sphi 0, %s64
      %s81 = sphi 0, %s65
      %s85 = sphi 0, %s85
      %s87 = sphi 0, %s85
      %s88 = sphi 0, %s87
      %s102 = sphi 0, %s88
      %s106 = sphi 0, %s106
      %s108 = sphi 0, %s106
      %s109 = sphi 0, %s108
      %s123 = sphi 0, %s109
      %s131 = sphi 0, %s133
      %s134 = sphi 0, %s131
      %s135 = sphi 0, %s134
      %s151 = sphi 0, %s135
    $region4: #{tpu_custom_call.1} parent=1 // loop_header_branch
      %16 = sbr.rel (%p14) target = $region8
    $region5: #{tpu_custom_call.1} parent=1 // loop_body
      %s18 = ssub.s32 %s13, 1
      %s19 = ssub.s32 %s13, 2
      %s26 = sadd.s32 1, %s21
      %p27 = scmp.ge.s32.totalorder %s26, 3
      %s28 = scalar_select %p27, 0, %s26
      %s29 = sadd.s32 1, %s20
      %s30 = scalar_select %p27, %s29, %s20
      %p31 = scmp.ge.s32.totalorder %s30, 3
      %s32 = scalar_select %p31, 0, %s30
      %s33 = ssub.s32 %s20, %s32
      %p34 = scmp.eq.s32.totalorder %s33, 0
      %s36 = sadd.s32 %s35, 1
      %s37 = scalar_select %p34, %s35, %s36
      %p40 = pneg %p34
      %p41 = scmp.eq.s32.totalorder %s13, 8
      %p42 = por %p40, %p41
      %p43 = scmp.ne.s32.totalorder %s35, %s38
      %p44 = scmp.eq.s32.totalorder %s13, 0
      %p45 = por %p43, %p44
      %p46 = scmp.ne.s32.totalorder %s35, %s38
      %p47 = scmp.eq.s32.totalorder %s18, 8
      %p48 = por %p46, %p47
      %p49 = scmp.ne.s32.totalorder %s38, %s39
      %p50 = scmp.eq.s32.totalorder %s18, 0
      %p51 = por %p49, %p50
      %p52 = scmp.ne.s32.totalorder %s38, %s39
      %p53 = scmp.eq.s32.totalorder %s19, 8
      %p54 = por %p52, %p53
      %p56 = scmp.ne.s32.totalorder %s39, %s55
      %p57 = scmp.eq.s32.totalorder %s19, 0
      %p58 = por %p56, %p57
      %s59 = ssub.s32 %s21, %s28
      %p60 = scmp.eq.s32.totalorder %s59, 0
      %s62 = sadd.s32 %s61, 1
      %s63 = scalar_select %p60, %s61, %s62
      %p66 = pneg %p60
      %p67 = scmp.eq.s32.totalorder %s13, 8
      %p68 = por %p66, %p67
      %p69 = scmp.ne.s32.totalorder %s61, %s64
      %p70 = scmp.eq.s32.totalorder %s13, 0
      %p71 = por %p69, %p70
      %p72 = scmp.ne.s32.totalorder %s61, %s64
      %p73 = scmp.eq.s32.totalorder %s18, 8
      %p74 = por %p72, %p73
      %p75 = scmp.ne.s32.totalorder %s64, %s65
      %p76 = scmp.eq.s32.totalorder %s18, 0
      %p77 = por %p75, %p76
      %p78 = scmp.ne.s32.totalorder %s64, %s65
      %p79 = scmp.eq.s32.totalorder %s19, 8
      %p80 = por %p78, %p79
      %p82 = scmp.ne.s32.totalorder %s65, %s81
      %p83 = scmp.eq.s32.totalorder %s19, 0
      %p84 = por %p82, %p83
      %s86 = sadd.s32 %s85, 1
      %p89 = scmp.eq.s32.totalorder %s13, 8
      %p90 = scmp.ne.s32.totalorder %s85, %s87
      %p91 = scmp.eq.s32.totalorder %s13, 0
      %p92 = por %p90, %p91
      %p93 = scmp.ne.s32.totalorder %s85, %s87
      %p94 = scmp.eq.s32.totalorder %s18, 8
      %p95 = por %p93, %p94
      %p96 = scmp.ne.s32.totalorder %s87, %s88
      %p97 = scmp.eq.s32.totalorder %s18, 0
      %p98 = por %p96, %p97
      %p99 = scmp.ne.s32.totalorder %s87, %s88
      %p100 = scmp.eq.s32.totalorder %s19, 8
      %p101 = por %p99, %p100
      %p103 = scmp.ne.s32.totalorder %s88, %s102
      %p104 = scmp.eq.s32.totalorder %s19, 0
      %p105 = por %p103, %p104
      %s107 = sadd.s32 %s106, 1
      %p110 = scmp.eq.s32.totalorder %s13, 8
      %p111 = scmp.ne.s32.totalorder %s106, %s108
      %p112 = scmp.eq.s32.totalorder %s13, 0
      %p113 = por %p111, %p112
      %p114 = scmp.ne.s32.totalorder %s106, %s108
      %p115 = scmp.eq.s32.totalorder %s18, 8
      %p116 = por %p114, %p115
      %p117 = scmp.ne.s32.totalorder %s108, %s109
      %p118 = scmp.eq.s32.totalorder %s18, 0
      %p119 = por %p117, %p118
      %p120 = scmp.ne.s32.totalorder %s108, %s109
      %p121 = scmp.eq.s32.totalorder %s19, 8
      %p122 = por %p120, %p121
      %p124 = scmp.ne.s32.totalorder %s109, %s123
      %p125 = scmp.eq.s32.totalorder %s19, 0
      %p126 = por %p124, %p125
      %s127 = ssub.s32 %s20, %s32
      %s128 = ssub.s32 %s21, %s28
      %s129 = sor.u32 %s127, %s128
      %p130 = scmp.eq.s32.totalorder %s129, 0
      %s132 = sadd.s32 %s131, 1
      %s133 = scalar_select %p130, %s131, %s132
      %p136 = pneg %p130
      %p137 = scmp.eq.s32.totalorder %s13, 8
      %p138 = por %p136, %p137
      %p139 = scmp.ne.s32.totalorder %s131, %s134
      %p140 = scmp.eq.s32.totalorder %s13, 0
      %p141 = por %p139, %p140
      %p142 = scmp.ne.s32.totalorder %s131, %s134
      %p143 = scmp.eq.s32.totalorder %s18, 8
      %p144 = por %p142, %p143
      %p145 = scmp.ne.s32.totalorder %s134, %s135
      %p146 = scmp.eq.s32.totalorder %s18, 0
      %p147 = por %p145, %p146
      %p148 = scmp.ne.s32.totalorder %s134, %s135
      %p149 = scmp.eq.s32.totalorder %s19, 8
      %p150 = por %p148, %p149
      %p152 = scmp.ne.s32.totalorder %s135, %s151
      %p153 = scmp.eq.s32.totalorder %s19, 0
      %p154 = por %p152, %p153
      %p155 = scmp.le.s32.totalorder 1, %s13
      %p156 = scmp.lt.s32.totalorder %s13, 10
      %p157 = pnand %p155, %p156
      %p158 = pneg %p157
      // Predicated region
      $region9: #{tpu_custom_call.1} parent=5 // pred_check
        _
      $region10: #{tpu_custom_call.1} parent=5 // pred_check_branch
        %160 = sbr.rel (%p157) target = $region12
      $region11: #{tpu_custom_call.1} parent=5 // pred_region
        %s161 = ssub.s32 %s13, 1
        // Predicated region
        $region13: #{tpu_custom_call.1} parent=11 // pred_check
          %p162 = pneg %p98
        $region14: #{tpu_custom_call.1} parent=11 // pred_check_branch
          %164 = sbr.rel (%p162) target = $region16
        $region15: #{tpu_custom_call.1} parent=11 // pred_region
          _
        $region16: #{tpu_custom_call.1} parent=11 // pred_fallthru
          _
        // Predicated region
        $region17: #{tpu_custom_call.1} parent=11 // pred_check
          %p165 = pneg %p119
        $region18: #{tpu_custom_call.1} parent=11 // pred_check_branch
          %167 = sbr.rel (%p165) target = $region20
        $region19: #{tpu_custom_call.1} parent=11 // pred_region
          _
        $region20: #{tpu_custom_call.1} parent=11 // pred_fallthru
          _
      $region12: #{tpu_custom_call.1} parent=5 // pred_fallthru
        _
      %p168 = scmp.lt.s32.totalorder %s13, 9
      // Predicated region
      $region21: #{tpu_custom_call.1} parent=5 // pred_check
        %p169 = pneg %p168
      $region22: #{tpu_custom_call.1} parent=5 // pred_check_branch
        %171 = sbr.rel (%p169) target = $region24
      $region23: #{tpu_custom_call.1} parent=5 // pred_region
        // Predicated region
        $region25: #{tpu_custom_call.1} parent=23 // pred_check
          %p172 = pneg %p45
        $region26: #{tpu_custom_call.1} parent=23 // pred_check_branch
          %174 = sbr.rel (%p172) target = $region28
        $region27: #{tpu_custom_call.1} parent=23 // pred_region
          %s175 = smul.u32 8, %s20
          %p176 = scmp.lt.s32.totalorder %s175, 23
          %s177 = scalar_select %p176, %s175, 23
          %s178 = smul.addr %s177, 8
          %s179 = scalar_lea.vmem %s0, %s178
          %s180 = smul.u32 8, %s20
        $region28: #{tpu_custom_call.1} parent=23 // pred_fallthru
          _
        // Predicated region
        $region29: #{tpu_custom_call.1} parent=23 // pred_check
          %p181 = pneg %p71
        $region30: #{tpu_custom_call.1} parent=23 // pred_check_branch
          %183 = sbr.rel (%p181) target = $region32
        $region31: #{tpu_custom_call.1} parent=23 // pred_region
          %s184 = smul.u32 16, %s21
          %p185 = scmp.lt.s32.totalorder %s184, 47
          %s186 = scalar_select %p185, %s184, 47
          %s187 = smul.addr %s186, 8
          %s188 = scalar_lea.vmem %s1, %s187
          %s189 = smul.u32 16, %s21
        $region32: #{tpu_custom_call.1} parent=23 // pred_fallthru
          _
      $region24: #{tpu_custom_call.1} parent=5 // pred_fallthru
        _
      %p190 = scmp.le.s32.totalorder 1, %s13
      %p191 = scmp.lt.s32.totalorder %s13, 10
      %p192 = pnand %p190, %p191
      %p193 = pneg %p192
      // Predicated region
      $region33: #{tpu_custom_call.1} parent=5 // pred_check
        _
      $region34: #{tpu_custom_call.1} parent=5 // pred_check_branch
        %195 = sbr.rel (%p192) target = $region36
      $region35: #{tpu_custom_call.1} parent=5 // pred_region
        %s196 = ssub.s32 %s13, 1
        %s197 = smul.u32 8, %s22
        %p198 = scmp.lt.s32.totalorder %s197, 23
        %s199 = scalar_select %p198, %s197, 23
        %s200 = smul.addr %s199, 8
        %s201 = scalar_lea.vmem %s0, %s200
        %p202 = pneg %p51
        %p203 = pneg %p48
        %s204 = smul.u32 16, %s23
        %p205 = scmp.lt.s32.totalorder %s204, 47
        %s206 = scalar_select %p205, %s204, 47
        %s207 = smul.addr %s206, 8
        %s208 = scalar_lea.vmem %s1, %s207
        %p209 = pneg %p77
        %p210 = pneg %p74
        %p211 = pneg %p98
        %p212 = pneg %p95
        %p213 = pneg %p119
        %p214 = pneg %p116
        %p215 = pneg %p147
        %p216 = pneg %p144
        %s217 = sand.u32 %s134, 1
        %s218 = scalar_lea.sflag [#allocation3], %s217
        %s219 = sand.u32 %s134, 1
        %s220 = smul.addr %s219, 64
        %s221 = scalar_lea.vmem [#allocation2], %s220
        %s222 = smul.u32 8, %s22
        %p223 = scmp.lt.s32.totalorder %s222, 23
        %s224 = scalar_select %p223, %s222, 23
        %s225 = smul.addr %s224, 8
        %s226 = scalar_lea.vmem %s0, %s225
        %s227 = smul.u32 8, %s22
        %s228 = smul.u32 16, %s23
        %p229 = scmp.lt.s32.totalorder %s228, 47
        %s230 = scalar_select %p229, %s228, 47
        %s231 = smul.addr %s230, 8
        %s232 = scalar_lea.vmem %s1, %s231
        %s233 = smul.u32 16, %s23
        %s234 = smul.u32 8, %s22
        %v236 = vld [vmem:[%s226] sm:$0xff]
        %v237 = vld [vmem:[%s226 + $0x8] sm:$0xff]
        %v238 = vld [vmem:[%s226 + $0x10] sm:$0xff]
        %v239 = vld [vmem:[%s226 + $0x18] sm:$0xff]
        %v240 = vld [vmem:[%s226 + $0x20] sm:$0xff]
        %v241 = vld [vmem:[%s226 + $0x28] sm:$0xff]
        %v242 = vld [vmem:[%s226 + $0x30] sm:$0xff]
        %v243 = vld [vmem:[%s226 + $0x38] sm:$0xff]
        %v244 = vld [vmem:[%s2] sm:$0x1]
        %v245 = vld [vmem:[%s2 + $0x1] sm:$0x1]
        %v246 = vld [vmem:[%s2 + $0x8] sm:$0xff]
        %v247 = vld [vmem:[%s2 + $0x10] sm:$0xff]
        %v248 = vld [vmem:[%s2 + $0x18] sm:$0xff]
        %v249 = vld [vmem:[%s2 + $0x20] sm:$0xff]
        %v250 = vld [vmem:[%s2 + $0x28] sm:$0xff]
        %v251 = vld [vmem:[%s2 + $0x30] sm:$0xff]
        %v252 = vld [vmem:[%s2 + $0x38] sm:$0xff]
        %v253 = vld [vmem:[%s2 + $0x40] sm:$0xff]
        %v254 = vld [vmem:[%s2 + $0x48] sm:$0xff]
        %v255 = vld [vmem:[%s2 + $0x50] sm:$0xff]
        %v256 = vld [vmem:[%s2 + $0x58] sm:$0xff]
        %v257 = vld [vmem:[%s2 + $0x60] sm:$0xff]
        %v258 = vld [vmem:[%s2 + $0x68] sm:$0xff]
        %v259 = vld [vmem:[%s2 + $0x70] sm:$0xff]
        %v260 = vld [vmem:[%s2 + $0x78] sm:$0xff]
        %v261 = vld [vmem:[%s2 + $0x80] sm:$0xff]
        %v262 = vld [vmem:[%s2 + $0x88] sm:$0x1]
        %v263 = vld [vmem:[%s2 + $0x90] sm:$0xff]
        %v264 = vld [vmem:[%s2 + $0x98] sm:$0xff]
        %v265 = vld [vmem:[%s2 + $0xa0] sm:$0xff]
        %v266 = vld [vmem:[%s2 + $0xa8] sm:$0xff]
        %v267 = vld [vmem:[%s2 + $0xb0] sm:$0xff]
        %v268 = vld [vmem:[%s2 + $0xb8] sm:$0xff]
        %v269 = vld [vmem:[%s2 + $0xc0] sm:$0xff]
        %v270 = vld [vmem:[%s2 + $0xc8] sm:$0xff]
        %v271 = vld [vmem:[%s2 + $0xd0] sm:$0xff]
        %v272 = vld [vmem:[%s2 + $0xd8] sm:$0xff]
        %v273 = vld [vmem:[%s2 + $0xe0] sm:$0xff]
        %v274 = vld [vmem:[%s2 + $0xe8] sm:$0xff]
        %v275 = vld [vmem:[%s2 + $0xf0] sm:$0xff]
        %v276 = vld [vmem:[%s2 + $0xf8] sm:$0xff]
        %v277 = vld [vmem:[%s2 + $0x100] sm:$0xff]
        %v278 = vld [vmem:[%s2 + $0x108] sm:$0xff]
        %v279 = vld [vmem:[%s2 + $0x110] sm:$0x1]
        %281 = vset.pattern.permute.xlu0 0
        %282 = vperm.xlu0 %281, %v236
        %v283 = vpop.permute.xlu0 %282
        %286 = vset.pattern.permute.xlu0 0
        %287 = vperm.xlu0 %286, %v237
        %v288 = vpop.permute.xlu0 %287
        %291 = vset.pattern.permute.xlu0 0
        %292 = vperm.xlu0 %291, %v238
        %v293 = vpop.permute.xlu0 %292
        %296 = vset.pattern.permute.xlu0 0
        %297 = vperm.xlu0 %296, %v239
        %v298 = vpop.permute.xlu0 %297
        %301 = vset.pattern.permute.xlu0 0
        %302 = vperm.xlu0 %301, %v240
        %v303 = vpop.permute.xlu0 %302
        %306 = vset.pattern.permute.xlu0 0
        %307 = vperm.xlu0 %306, %v241
        %v308 = vpop.permute.xlu0 %307
        %311 = vset.pattern.permute.xlu0 0
        %312 = vperm.xlu0 %311, %v242
        %v313 = vpop.permute.xlu0 %312
        %316 = vset.pattern.permute.xlu0 0
        %317 = vperm.xlu0 %316, %v243
        %v318 = vpop.permute.xlu0 %317
        %v320 = vlaneseq
        %v321 = vshrl.u32 %v320, 7
        %v322 = vsub.s32 0, %v321
        %v323 = vrot.slane %v244, %v322
        %v324 = vmul.f32 %v283, %v323
        %v325 = vmul.f32 %v288, %v323
        %v326 = vmul.f32 %v293, %v323
        %v327 = vmul.f32 %v298, %v323
        %v328 = vmul.f32 %v303, %v323
        %v329 = vmul.f32 %v308, %v323
        %v330 = vmul.f32 %v313, %v323
        %v331 = vmul.f32 %v318, %v323
        %v332 = vlaneseq
        %v333 = vshrl.u32 %v332, 7
        %v334 = vsub.s32 0, %v333
        %v335 = vrot.slane %v245, %v334
        %v336 = vadd.f32 %v324, %v335
        %v337 = vadd.f32 %v325, %v335
        %v338 = vadd.f32 %v326, %v335
        %v339 = vadd.f32 %v327, %v335
        %v340 = vadd.f32 %v328, %v335
        %v341 = vadd.f32 %v329, %v335
        %v342 = vadd.f32 %v330, %v335
        %v343 = vadd.f32 %v331, %v335
        %v344 = vmax.f32 %v336, 0.0
        %v345 = vmax.f32 %v337, 0.0
        %v346 = vmax.f32 %v338, 0.0
        %v347 = vmax.f32 %v339, 0.0
        %v348 = vmax.f32 %v340, 0.0
        %v349 = vmax.f32 %v341, 0.0
        %v350 = vmax.f32 %v342, 0.0
        %v351 = vmax.f32 %v343, 0.0
        %v352 = vpack.c.bf16 %v345, %v344
        %v353 = vpack.c.bf16 %v347, %v346
        %v354 = vpack.c.bf16 %v349, %v348
        %v355 = vpack.c.bf16 %v351, %v350
        %v356 = vpack.c.bf16 %v247, %v246
        %v357 = vpack.c.bf16 %v249, %v248
        %v358 = vpack.c.bf16 %v251, %v250
        %v359 = vpack.c.bf16 %v253, %v252
        %v360 = vpack.c.bf16 %v255, %v254
        %v361 = vpack.c.bf16 %v257, %v256
        %v362 = vpack.c.bf16 %v259, %v258
        %v363 = vpack.c.bf16 %v261, %v260
        %v364 = vlaneseq
        %v365 = vshrl.u32 %v364, 7
        %v366 = vsub.s32 0, %v365
        %v367 = vrot.slane %v262, %v366
        %368 = vmatprep.subr.bf16.mxu0 0
        %369 = vmatpush1.bf16.msra.mxu0 %v356
        %370 = vmatprep.subr.bf16.mxu0 0
        %371 = vmatpush1.bf16.msra.mxu0 %v357
        %372 = vmatprep.subr.bf16.mxu0 0
        %373 = vmatpush1.bf16.msra.mxu0 %v358
        %374 = vmatprep.subr.bf16.mxu0 0
        %375 = vmatpush1.bf16.msra.mxu0 %v359
        %376 = vmatprep.subr.bf16.mxu0 0
        %377 = vmatpush1.bf16.msra.mxu0 %v360
        %378 = vmatprep.subr.bf16.mxu0 0
        %379 = vmatpush1.bf16.msra.mxu0 %v361
        %380 = vmatprep.subr.bf16.mxu0 0
        %381 = vmatpush1.bf16.msra.mxu0 %v362
        %382 = vmatprep.subr.bf16.mxu0 0
        %383 = vmatpush1.bf16.msra.mxu0 %v363
        %384 = vmatprep.subr.bf16.mxu0 0
        %385 = vmatpush1.bf16.msra.mxu0 0
        %386 = vmatprep.subr.bf16.mxu0 0
        %387 = vmatpush1.bf16.msra.mxu0 0
        %388 = vmatprep.subr.bf16.mxu0 0
        %389 = vmatpush1.bf16.msra.mxu0 0
        %390 = vmatprep.subr.bf16.mxu0 0
        %391 = vmatpush1.bf16.msra.mxu0 0
        %392 = vmatprep.subr.bf16.mxu0 0
        %393 = vmatpush1.bf16.msra.mxu0 0
        %394 = vmatprep.subr.bf16.mxu0 0
        %395 = vmatpush1.bf16.msra.mxu0 0
        %396 = vmatprep.subr.bf16.mxu0 0
        %397 = vmatpush1.bf16.msra.mxu0 0
        %398 = vmatprep.subr.bf16.mxu0 0
        %399 = vmatpush1.bf16.msra.mxu0 0
        %400 = vmatprep.mubr.bf16.mxu0 0
        %401 = vmatmul.mubr.bf16.gmra.mrb[0].mxu0 %v352
        %v402 = vpop.f32.mrb[0].mxu0
        %v403 = vadd.f32 %v367, %v402
        %v404 = vpop.f32.mrb[0].mxu0
        %v405 = vpop.f32.mrb[0].mxu0
        %v406 = vadd.f32 %v367, %v405
        %v407 = vpop.f32.mrb[0].mxu0
        %408 = vmatprep.mubr.bf16.mxu0 0
        %409 = vmatmul.mubr.bf16.gmra.mrb[0].mxu0 %v353
        %v410 = vpop.f32.mrb[0].mxu0
        %v411 = vadd.f32 %v367, %v410
        %v412 = vpop.f32.mrb[0].mxu0
        %v413 = vpop.f32.mrb[0].mxu0
        %v414 = vadd.f32 %v367, %v413
        %v415 = vpop.f32.mrb[0].mxu0
        %416 = vmatprep.mubr.bf16.mxu0 0
        %417 = vmatmul.mubr.bf16.gmra.mrb[0].mxu0 %v354
        %v418 = vpop.f32.mrb[0].mxu0
        %v419 = vadd.f32 %v367, %v418
        %v420 = vpop.f32.mrb[0].mxu0
        %v421 = vpop.f32.mrb[0].mxu0
        %v422 = vadd.f32 %v367, %v421
        %v423 = vpop.f32.mrb[0].mxu0
        %424 = vmatprep.mubr.bf16.mxu0 0
        %425 = vmatmul.mubr.bf16.gmra.mrb[0].mxu0 %v355
        %v426 = vpop.f32.mrb[0].mxu0
        %v427 = vadd.f32 %v367, %v426
        %v428 = vpop.f32.mrb[0].mxu0
        %v429 = vpop.f32.mrb[0].mxu0
        %v430 = vadd.f32 %v367, %v429
        %v431 = vpop.f32.mrb[0].mxu0
        %432 = vdwg.mxu0
        %v433 = vmax.f32 %v403, 0.0
        %v434 = vmax.f32 %v406, 0.0
        %v435 = vmax.f32 %v411, 0.0
        %v436 = vmax.f32 %v414, 0.0
        %v437 = vmax.f32 %v419, 0.0
        %v438 = vmax.f32 %v422, 0.0
        %v439 = vmax.f32 %v427, 0.0
        %v440 = vmax.f32 %v430, 0.0
        %v441 = vpack.c.bf16 %v434, %v433
        %v442 = vpack.c.bf16 %v436, %v435
        %v443 = vpack.c.bf16 %v438, %v437
        %v444 = vpack.c.bf16 %v440, %v439
        %v445 = vpack.c.bf16 %v264, %v263
        %v446 = vpack.c.bf16 %v266, %v265
        %v447 = vpack.c.bf16 %v268, %v267
        %v448 = vpack.c.bf16 %v270, %v269
        %v449 = vpack.c.bf16 %v272, %v271
        %v450 = vpack.c.bf16 %v274, %v273
        %v451 = vpack.c.bf16 %v276, %v275
        %v452 = vpack.c.bf16 %v278, %v277
        %v453 = vlaneseq
        %v454 = vshrl.u32 %v453, 7
        %v455 = vsub.s32 0, %v454
        %v456 = vrot.slane %v279, %v455
        %457 = vmatprep.subr.bf16.mxu0 0
        %458 = vmatpush1.bf16.msra.mxu0 %v445
        %459 = vmatprep.subr.bf16.mxu0 0
        %460 = vmatpush1.bf16.msra.mxu0 %v446
        %461 = vmatprep.subr.bf16.mxu0 0
        %462 = vmatpush1.bf16.msra.mxu0 %v447
        %463 = vmatprep.subr.bf16.mxu0 0
        %464 = vmatpush1.bf16.msra.mxu0 %v448
        %465 = vmatprep.subr.bf16.mxu0 0
        %466 = vmatpush1.bf16.msra.mxu0 %v449
        %467 = vmatprep.subr.bf16.mxu0 0
        %468 = vmatpush1.bf16.msra.mxu0 %v450
        %469 = vmatprep.subr.bf16.mxu0 0
        %470 = vmatpush1.bf16.msra.mxu0 %v451
        %471 = vmatprep.subr.bf16.mxu0 0
        %472 = vmatpush1.bf16.msra.mxu0 %v452
        %473 = vmatprep.subr.bf16.mxu0 0
        %474 = vmatpush1.bf16.msra.mxu0 0
        %475 = vmatprep.subr.bf16.mxu0 0
        %476 = vmatpush1.bf16.msra.mxu0 0
        %477 = vmatprep.subr.bf16.mxu0 0
        %478 = vmatpush1.bf16.msra.mxu0 0
        %479 = vmatprep.subr.bf16.mxu0 0
        %480 = vmatpush1.bf16.msra.mxu0 0
        %481 = vmatprep.subr.bf16.mxu0 0
        %482 = vmatpush1.bf16.msra.mxu0 0
        %483 = vmatprep.subr.bf16.mxu0 0
        %484 = vmatpush1.bf16.msra.mxu0 0
        %485 = vmatprep.subr.bf16.mxu0 0
        %486 = vmatpush1.bf16.msra.mxu0 0
        %487 = vmatprep.subr.bf16.mxu0 0
        %488 = vmatpush1.bf16.msra.mxu0 0
        %489 = vmatprep.mubr.bf16.mxu0 0
        %490 = vmatmul.mubr.bf16.gmra.mrb[0].mxu0 %v441
        %v491 = vpop.f32.mrb[0].mxu0
        %v492 = vadd.f32 %v456, %v491
        %v493 = vpop.f32.mrb[0].mxu0
        %v494 = vpop.f32.mrb[0].mxu0
        %v495 = vadd.f32 %v456, %v494
        %v496 = vpop.f32.mrb[0].mxu0
        %497 = vmatprep.mubr.bf16.mxu0 0
        %498 = vmatmul.mubr.bf16.gmra.mrb[0].mxu0 %v442
        %v499 = vpop.f32.mrb[0].mxu0
        %v500 = vadd.f32 %v456, %v499
        %v501 = vpop.f32.mrb[0].mxu0
        %v502 = vpop.f32.mrb[0].mxu0
        %v503 = vadd.f32 %v456, %v502
        %v504 = vpop.f32.mrb[0].mxu0
        %505 = vmatprep.mubr.bf16.mxu0 0
        %506 = vmatmul.mubr.bf16.gmra.mrb[0].mxu0 %v443
        %v507 = vpop.f32.mrb[0].mxu0
        %v508 = vadd.f32 %v456, %v507
        %v509 = vpop.f32.mrb[0].mxu0
        %v510 = vpop.f32.mrb[0].mxu0
        %v511 = vadd.f32 %v456, %v510
        %v512 = vpop.f32.mrb[0].mxu0
        %513 = vmatprep.mubr.bf16.mxu0 0
        %514 = vmatmul.mubr.bf16.gmra.mrb[0].mxu0 %v444
        %v515 = vpop.f32.mrb[0].mxu0
        %v516 = vadd.f32 %v456, %v515
        %v517 = vpop.f32.mrb[0].mxu0
        %v518 = vpop.f32.mrb[0].mxu0
        %v519 = vadd.f32 %v456, %v518
        %v520 = vpop.f32.mrb[0].mxu0
        %521 = vdwg.mxu0
        %v522 = vld [vmem:[%s232] sm:$0xff]
        %v523 = vld [vmem:[%s232 + $0x8] sm:$0xff]
        %v524 = vld [vmem:[%s232 + $0x10] sm:$0xff]
        %v525 = vld [vmem:[%s232 + $0x18] sm:$0xff]
        %v526 = vld [vmem:[%s232 + $0x20] sm:$0xff]
        %v527 = vld [vmem:[%s232 + $0x28] sm:$0xff]
        %v528 = vld [vmem:[%s232 + $0x30] sm:$0xff]
        %v529 = vld [vmem:[%s232 + $0x38] sm:$0xff]
        %v530 = vld [vmem:[%s232 + $0x40] sm:$0xff]
        %v531 = vld [vmem:[%s232 + $0x48] sm:$0xff]
        %v532 = vld [vmem:[%s232 + $0x50] sm:$0xff]
        %v533 = vld [vmem:[%s232 + $0x58] sm:$0xff]
        %v534 = vld [vmem:[%s232 + $0x60] sm:$0xff]
        %v535 = vld [vmem:[%s232 + $0x68] sm:$0xff]
        %v536 = vld [vmem:[%s232 + $0x70] sm:$0xff]
        %v537 = vld [vmem:[%s232 + $0x78] sm:$0xff]
        %v538 = vld [vmem:[%s3] sm:$0x1]
        %v539 = vld [vmem:[%s3 + $0x1] sm:$0x1]
        %v540 = vld [vmem:[%s3 + $0x8] sm:$0xff]
        %v541 = vld [vmem:[%s3 + $0x10] sm:$0xff]
        %v542 = vld [vmem:[%s3 + $0x18] sm:$0xff]
        %v543 = vld [vmem:[%s3 + $0x20] sm:$0xff]
        %v544 = vld [vmem:[%s3 + $0x28] sm:$0xff]
        %v545 = vld [vmem:[%s3 + $0x30] sm:$0xff]
        %v546 = vld [vmem:[%s3 + $0x38] sm:$0xff]
        %v547 = vld [vmem:[%s3 + $0x40] sm:$0xff]
        %v548 = vld [vmem:[%s3 + $0x48] sm:$0xff]
        %v549 = vld [vmem:[%s3 + $0x50] sm:$0xff]
        %v550 = vld [vmem:[%s3 + $0x58] sm:$0xff]
        %v551 = vld [vmem:[%s3 + $0x60] sm:$0xff]
        %v552 = vld [vmem:[%s3 + $0x68] sm:$0xff]
        %v553 = vld [vmem:[%s3 + $0x70] sm:$0xff]
        %v554 = vld [vmem:[%s3 + $0x78] sm:$0xff]
        %v555 = vld [vmem:[%s3 + $0x80] sm:$0xff]
        %v556 = vld [vmem:[%s3 + $0x88] sm:$0x1]
        %v557 = vld [vmem:[%s3 + $0x90] sm:$0xff]
        %v558 = vld [vmem:[%s3 + $0x98] sm:$0xff]
        %v559 = vld [vmem:[%s3 + $0xa0] sm:$0xff]
        %v560 = vld [vmem:[%s3 + $0xa8] sm:$0xff]
        %v561 = vld [vmem:[%s3 + $0xb0] sm:$0xff]
        %v562 = vld [vmem:[%s3 + $0xb8] sm:$0xff]
        %v563 = vld [vmem:[%s3 + $0xc0] sm:$0xff]
        %v564 = vld [vmem:[%s3 + $0xc8] sm:$0xff]
        %v565 = vld [vmem:[%s3 + $0xd0] sm:$0xff]
        %v566 = vld [vmem:[%s3 + $0xd8] sm:$0xff]
        %v567 = vld [vmem:[%s3 + $0xe0] sm:$0xff]
        %v568 = vld [vmem:[%s3 + $0xe8] sm:$0xff]
        %v569 = vld [vmem:[%s3 + $0xf0] sm:$0xff]
        %v570 = vld [vmem:[%s3 + $0xf8] sm:$0xff]
        %v571 = vld [vmem:[%s3 + $0x100] sm:$0xff]
        %v572 = vld [vmem:[%s3 + $0x108] sm:$0xff]
        %v573 = vld [vmem:[%s3 + $0x110] sm:$0x1]
        %575 = vset.pattern.permute.xlu0 0
        %576 = vperm.xlu0 %575, %v522
        %v577 = vpop.permute.xlu0 %576
        %580 = vset.pattern.permute.xlu0 0
        %581 = vperm.xlu0 %580, %v523
        %v582 = vpop.permute.xlu0 %581
        %585 = vset.pattern.permute.xlu0 0
        %586 = vperm.xlu0 %585, %v524
        %v587 = vpop.permute.xlu0 %586
        %590 = vset.pattern.permute.xlu0 0
        %591 = vperm.xlu0 %590, %v525
        %v592 = vpop.permute.xlu0 %591
        %595 = vset.pattern.permute.xlu0 0
        %596 = vperm.xlu0 %595, %v526
        %v597 = vpop.permute.xlu0 %596
        %600 = vset.pattern.permute.xlu0 0
        %601 = vperm.xlu0 %600, %v527
        %v602 = vpop.permute.xlu0 %601
        %605 = vset.pattern.permute.xlu0 0
        %606 = vperm.xlu0 %605, %v528
        %v607 = vpop.permute.xlu0 %606
        %610 = vset.pattern.permute.xlu0 0
        %611 = vperm.xlu0 %610, %v529
        %v612 = vpop.permute.xlu0 %611
        %615 = vset.pattern.permute.xlu0 0
        %616 = vperm.xlu0 %615, %v530
        %v617 = vpop.permute.xlu0 %616
        %620 = vset.pattern.permute.xlu0 0
        %621 = vperm.xlu0 %620, %v531
        %v622 = vpop.permute.xlu0 %621
        %625 = vset.pattern.permute.xlu0 0
        %626 = vperm.xlu0 %625, %v532
        %v627 = vpop.permute.xlu0 %626
        %630 = vset.pattern.permute.xlu0 0
        %631 = vperm.xlu0 %630, %v533
        %v632 = vpop.permute.xlu0 %631
        %635 = vset.pattern.permute.xlu0 0
        %636 = vperm.xlu0 %635, %v534
        %v637 = vpop.permute.xlu0 %636
        %640 = vset.pattern.permute.xlu0 0
        %641 = vperm.xlu0 %640, %v535
        %v642 = vpop.permute.xlu0 %641
        %645 = vset.pattern.permute.xlu0 0
        %646 = vperm.xlu0 %645, %v536
        %v647 = vpop.permute.xlu0 %646
        %650 = vset.pattern.permute.xlu0 0
        %651 = vperm.xlu0 %650, %v537
        %v652 = vpop.permute.xlu0 %651
        %v654 = vlaneseq
        %v655 = vshrl.u32 %v654, 7
        %v656 = vsub.s32 0, %v655
        %v657 = vrot.slane %v538, %v656
        %v658 = vmul.f32 %v577, %v657
        %v659 = vmul.f32 %v582, %v657
        %v660 = vmul.f32 %v587, %v657
        %v661 = vmul.f32 %v592, %v657
        %v662 = vmul.f32 %v597, %v657
        %v663 = vmul.f32 %v602, %v657
        %v664 = vmul.f32 %v607, %v657
        %v665 = vmul.f32 %v612, %v657
        %v666 = vmul.f32 %v617, %v657
        %v667 = vmul.f32 %v622, %v657
        %v668 = vmul.f32 %v627, %v657
        %v669 = vmul.f32 %v632, %v657
        %v670 = vmul.f32 %v637, %v657
        %v671 = vmul.f32 %v642, %v657
        %v672 = vmul.f32 %v647, %v657
        %v673 = vmul.f32 %v652, %v657
        %v674 = vlaneseq
        %v675 = vshrl.u32 %v674, 7
        %v676 = vsub.s32 0, %v675
        %v677 = vrot.slane %v539, %v676
        %v678 = vadd.f32 %v658, %v677
        %v679 = vadd.f32 %v659, %v677
        %v680 = vadd.f32 %v660, %v677
        %v681 = vadd.f32 %v661, %v677
        %v682 = vadd.f32 %v662, %v677
        %v683 = vadd.f32 %v663, %v677
        %v684 = vadd.f32 %v664, %v677
        %v685 = vadd.f32 %v665, %v677
        %v686 = vadd.f32 %v666, %v677
        %v687 = vadd.f32 %v667, %v677
        %v688 = vadd.f32 %v668, %v677
        %v689 = vadd.f32 %v669, %v677
        %v690 = vadd.f32 %v670, %v677
        %v691 = vadd.f32 %v671, %v677
        %v692 = vadd.f32 %v672, %v677
        %v693 = vadd.f32 %v673, %v677
        %v694 = vmax.f32 %v678, 0.0
        %v695 = vmax.f32 %v679, 0.0
        %v696 = vmax.f32 %v680, 0.0
        %v697 = vmax.f32 %v681, 0.0
        %v698 = vmax.f32 %v682, 0.0
        %v699 = vmax.f32 %v683, 0.0
        %v700 = vmax.f32 %v684, 0.0
        %v701 = vmax.f32 %v685, 0.0
        %v702 = vmax.f32 %v686, 0.0
        %v703 = vmax.f32 %v687, 0.0
        %v704 = vmax.f32 %v688, 0.0
        %v705 = vmax.f32 %v689, 0.0
        %v706 = vmax.f32 %v690, 0.0
        %v707 = vmax.f32 %v691, 0.0
        %v708 = vmax.f32 %v692, 0.0
        %v709 = vmax.f32 %v693, 0.0
        %v710 = vpack.c.bf16 %v695, %v694
        %v711 = vpack.c.bf16 %v697, %v696
        %v712 = vpack.c.bf16 %v699, %v698
        %v713 = vpack.c.bf16 %v701, %v700
        %v714 = vpack.c.bf16 %v703, %v702
        %v715 = vpack.c.bf16 %v705, %v704
        %v716 = vpack.c.bf16 %v707, %v706
        %v717 = vpack.c.bf16 %v709, %v708
        %v718 = vpack.c.bf16 %v541, %v540
        %v719 = vpack.c.bf16 %v543, %v542
        %v720 = vpack.c.bf16 %v545, %v544
        %v721 = vpack.c.bf16 %v547, %v546
        %v722 = vpack.c.bf16 %v549, %v548
        %v723 = vpack.c.bf16 %v551, %v550
        %v724 = vpack.c.bf16 %v553, %v552
        %v725 = vpack.c.bf16 %v555, %v554
        %v726 = vlaneseq
        %v727 = vshrl.u32 %v726, 7
        %v728 = vsub.s32 0, %v727
        %v729 = vrot.slane %v556, %v728
        %730 = vmatprep.subr.bf16.mxu0 0
        %731 = vmatpush1.bf16.msra.mxu0 %v718
        %732 = vmatprep.subr.bf16.mxu0 0
        %733 = vmatpush1.bf16.msra.mxu0 %v719
        %734 = vmatprep.subr.bf16.mxu0 0
        %735 = vmatpush1.bf16.msra.mxu0 %v720
        %736 = vmatprep.subr.bf16.mxu0 0
        %737 = vmatpush1.bf16.msra.mxu0 %v721
        %738 = vmatprep.subr.bf16.mxu0 0
        %739 = vmatpush1.bf16.msra.mxu0 %v722
        %740 = vmatprep.subr.bf16.mxu0 0
        %741 = vmatpush1.bf16.msra.mxu0 %v723
        %742 = vmatprep.subr.bf16.mxu0 0
        %743 = vmatpush1.bf16.msra.mxu0 %v724
        %744 = vmatprep.subr.bf16.mxu0 0
        %745 = vmatpush1.bf16.msra.mxu0 %v725
        %746 = vmatprep.subr.bf16.mxu0 0
        %747 = vmatpush1.bf16.msra.mxu0 0
        %748 = vmatprep.subr.bf16.mxu0 0
        %749 = vmatpush1.bf16.msra.mxu0 0
        %750 = vmatprep.subr.bf16.mxu0 0
        %751 = vmatpush1.bf16.msra.mxu0 0
        %752 = vmatprep.subr.bf16.mxu0 0
        %753 = vmatpush1.bf16.msra.mxu0 0
        %754 = vmatprep.subr.bf16.mxu0 0
        %755 = vmatpush1.bf16.msra.mxu0 0
        %756 = vmatprep.subr.bf16.mxu0 0
        %757 = vmatpush1.bf16.msra.mxu0 0
        %758 = vmatprep.subr.bf16.mxu0 0
        %759 = vmatpush1.bf16.msra.mxu0 0
        %760 = vmatprep.subr.bf16.mxu0 0
        %761 = vmatpush1.bf16.msra.mxu0 0
        %762 = vmatprep.mubr.bf16.mxu0 0
        %763 = vmatmul.mubr.bf16.gmra.mrb[0].mxu0 %v710
        %v764 = vpop.f32.mrb[0].mxu0
        %v765 = vadd.f32 %v729, %v764
        %v766 = vpop.f32.mrb[0].mxu0
        %v767 = vpop.f32.mrb[0].mxu0
        %v768 = vadd.f32 %v729, %v767
        %v769 = vpop.f32.mrb[0].mxu0
        %770 = vmatprep.mubr.bf16.mxu0 0
        %771 = vmatmul.mubr.bf16.gmra.mrb[0].mxu0 %v711
        %v772 = vpop.f32.mrb[0].mxu0
        %v773 = vadd.f32 %v729, %v772
        %v774 = vpop.f32.mrb[0].mxu0
        %v775 = vpop.f32.mrb[0].mxu0
        %v776 = vadd.f32 %v729, %v775
        %v777 = vpop.f32.mrb[0].mxu0
        %778 = vmatprep.mubr.bf16.mxu0 0
        %779 = vmatmul.mubr.bf16.gmra.mrb[0].mxu0 %v712
        %v780 = vpop.f32.mrb[0].mxu0
        %v781 = vadd.f32 %v729, %v780
        %v782 = vpop.f32.mrb[0].mxu0
        %v783 = vpop.f32.mrb[0].mxu0
        %v784 = vadd.f32 %v729, %v783
        %v785 = vpop.f32.mrb[0].mxu0
        %786 = vmatprep.mubr.bf16.mxu0 0
        %787 = vmatmul.mubr.bf16.gmra.mrb[0].mxu0 %v713
        %v788 = vpop.f32.mrb[0].mxu0
        %v789 = vadd.f32 %v729, %v788
        %v790 = vpop.f32.mrb[0].mxu0
        %v791 = vpop.f32.mrb[0].mxu0
        %v792 = vadd.f32 %v729, %v791
        %v793 = vpop.f32.mrb[0].mxu0
        %794 = vmatprep.mubr.bf16.mxu0 0
        %795 = vmatmul.mubr.bf16.gmra.mrb[0].mxu0 %v714
        %v796 = vpop.f32.mrb[0].mxu0
        %v797 = vadd.f32 %v729, %v796
        %v798 = vpop.f32.mrb[0].mxu0
        %v799 = vpop.f32.mrb[0].mxu0
        %v800 = vadd.f32 %v729, %v799
        %v801 = vpop.f32.mrb[0].mxu0
        %802 = vmatprep.mubr.bf16.mxu0 0
        %803 = vmatmul.mubr.bf16.gmra.mrb[0].mxu0 %v715
        %v804 = vpop.f32.mrb[0].mxu0
        %v805 = vadd.f32 %v729, %v804
        %v806 = vpop.f32.mrb[0].mxu0
        %v807 = vpop.f32.mrb[0].mxu0
        %v808 = vadd.f32 %v729, %v807
        %v809 = vpop.f32.mrb[0].mxu0
        %810 = vmatprep.mubr.bf16.mxu0 0
        %811 = vmatmul.mubr.bf16.gmra.mrb[0].mxu0 %v716
        %v812 = vpop.f32.mrb[0].mxu0
        %v813 = vadd.f32 %v729, %v812
        %v814 = vpop.f32.mrb[0].mxu0
        %v815 = vpop.f32.mrb[0].mxu0
        %v816 = vadd.f32 %v729, %v815
        %v817 = vpop.f32.mrb[0].mxu0
        %818 = vmatprep.mubr.bf16.mxu0 0
        %819 = vmatmul.mubr.bf16.gmra.mrb[0].mxu0 %v717
        %v820 = vpop.f32.mrb[0].mxu0
        %v821 = vadd.f32 %v729, %v820
        %v822 = vpop.f32.mrb[0].mxu0
        %v823 = vpop.f32.mrb[0].mxu0
        %v824 = vadd.f32 %v729, %v823
        %v825 = vpop.f32.mrb[0].mxu0
        %826 = vdwg.mxu0
        %v827 = vmax.f32 %v765, 0.0
        %v828 = vmax.f32 %v768, 0.0
        %v829 = vmax.f32 %v773, 0.0
        %v830 = vmax.f32 %v776, 0.0
        %v831 = vmax.f32 %v781, 0.0
        %v832 = vmax.f32 %v784, 0.0
        %v833 = vmax.f32 %v789, 0.0
        %v834 = vmax.f32 %v792, 0.0
        %v835 = vmax.f32 %v797, 0.0
        %v836 = vmax.f32 %v800, 0.0
        %v837 = vmax.f32 %v805, 0.0
        %v838 = vmax.f32 %v808, 0.0
        %v839 = vmax.f32 %v813, 0.0
        %v840 = vmax.f32 %v816, 0.0
        %v841 = vmax.f32 %v821, 0.0
        %v842 = vmax.f32 %v824, 0.0
        %v843 = vpack.c.bf16 %v828, %v827
        %v844 = vpack.c.bf16 %v830, %v829
        %v845 = vpack.c.bf16 %v832, %v831
        %v846 = vpack.c.bf16 %v834, %v833
        %v847 = vpack.c.bf16 %v836, %v835
        %v848 = vpack.c.bf16 %v838, %v837
        %v849 = vpack.c.bf16 %v840, %v839
        %v850 = vpack.c.bf16 %v842, %v841
        %v851 = vpack.c.bf16 %v558, %v557
        %v852 = vpack.c.bf16 %v560, %v559
        %v853 = vpack.c.bf16 %v562, %v561
        %v854 = vpack.c.bf16 %v564, %v563
        %v855 = vpack.c.bf16 %v566, %v565
        %v856 = vpack.c.bf16 %v568, %v567
        %v857 = vpack.c.bf16 %v570, %v569
        %v858 = vpack.c.bf16 %v572, %v571
        %v859 = vlaneseq
        %v860 = vshrl.u32 %v859, 7
        %v861 = vsub.s32 0, %v860
        %v862 = vrot.slane %v573, %v861
        %863 = vmatprep.subr.bf16.mxu0 0
        %864 = vmatpush1.bf16.msra.mxu0 %v851
        %865 = vmatprep.subr.bf16.mxu0 0
        %866 = vmatpush1.bf16.msra.mxu0 %v852
        %867 = vmatprep.subr.bf16.mxu0 0
        %868 = vmatpush1.bf16.msra.mxu0 %v853
        %869 = vmatprep.subr.bf16.mxu0 0
        %870 = vmatpush1.bf16.msra.mxu0 %v854
        %871 = vmatprep.subr.bf16.mxu0 0
        %872 = vmatpush1.bf16.msra.mxu0 %v855
        %873 = vmatprep.subr.bf16.mxu0 0
        %874 = vmatpush1.bf16.msra.mxu0 %v856
        %875 = vmatprep.subr.bf16.mxu0 0
        %876 = vmatpush1.bf16.msra.mxu0 %v857
        %877 = vmatprep.subr.bf16.mxu0 0
        %878 = vmatpush1.bf16.msra.mxu0 %v858
        %879 = vmatprep.subr.bf16.mxu0 0
        %880 = vmatpush1.bf16.msra.mxu0 0
        %881 = vmatprep.subr.bf16.mxu0 0
        %882 = vmatpush1.bf16.msra.mxu0 0
        %883 = vmatprep.subr.bf16.mxu0 0
        %884 = vmatpush1.bf16.msra.mxu0 0
        %885 = vmatprep.subr.bf16.mxu0 0
        %886 = vmatpush1.bf16.msra.mxu0 0
        %887 = vmatprep.subr.bf16.mxu0 0
        %888 = vmatpush1.bf16.msra.mxu0 0
        %889 = vmatprep.subr.bf16.mxu0 0
        %890 = vmatpush1.bf16.msra.mxu0 0
        %891 = vmatprep.subr.bf16.mxu0 0
        %892 = vmatpush1.bf16.msra.mxu0 0
        %893 = vmatprep.subr.bf16.mxu0 0
        %894 = vmatpush1.bf16.msra.mxu0 0
        %895 = vmatprep.mubr.bf16.mxu0 0
        %896 = vmatmul.mubr.bf16.gmra.mrb[0].mxu0 %v843
        %v897 = vpop.f32.mrb[0].mxu0
        %v898 = vadd.f32 %v862, %v897
        %v899 = vpop.f32.mrb[0].mxu0
        %v900 = vpop.f32.mrb[0].mxu0
        %v901 = vadd.f32 %v862, %v900
        %v902 = vpop.f32.mrb[0].mxu0
        %903 = vmatprep.mubr.bf16.mxu0 0
        %904 = vmatmul.mubr.bf16.gmra.mrb[0].mxu0 %v844
        %v905 = vpop.f32.mrb[0].mxu0
        %v906 = vadd.f32 %v862, %v905
        %v907 = vpop.f32.mrb[0].mxu0
        %v908 = vpop.f32.mrb[0].mxu0
        %v909 = vadd.f32 %v862, %v908
        %v910 = vpop.f32.mrb[0].mxu0
        %911 = vmatprep.mubr.bf16.mxu0 0
        %912 = vmatmul.mubr.bf16.gmra.mrb[0].mxu0 %v845
        %v913 = vpop.f32.mrb[0].mxu0
        %v914 = vadd.f32 %v862, %v913
        %v915 = vpop.f32.mrb[0].mxu0
        %v916 = vpop.f32.mrb[0].mxu0
        %v917 = vadd.f32 %v862, %v916
        %v918 = vpop.f32.mrb[0].mxu0
        %919 = vmatprep.mubr.bf16.mxu0 0
        %920 = vmatmul.mubr.bf16.gmra.mrb[0].mxu0 %v846
        %v921 = vpop.f32.mrb[0].mxu0
        %v922 = vadd.f32 %v862, %v921
        %v923 = vpop.f32.mrb[0].mxu0
        %v924 = vpop.f32.mrb[0].mxu0
        %v925 = vadd.f32 %v862, %v924
        %v926 = vpop.f32.mrb[0].mxu0
        %927 = vmatprep.mubr.bf16.mxu0 0
        %928 = vmatmul.mubr.bf16.gmra.mrb[0].mxu0 %v847
        %v929 = vpop.f32.mrb[0].mxu0
        %v930 = vadd.f32 %v862, %v929
        %v931 = vpop.f32.mrb[0].mxu0
        %v932 = vpop.f32.mrb[0].mxu0
        %v933 = vadd.f32 %v862, %v932
        %v934 = vpop.f32.mrb[0].mxu0
        %935 = vmatprep.mubr.bf16.mxu0 0
        %936 = vmatmul.mubr.bf16.gmra.mrb[0].mxu0 %v848
        %v937 = vpop.f32.mrb[0].mxu0
        %v938 = vadd.f32 %v862, %v937
        %v939 = vpop.f32.mrb[0].mxu0
        %v940 = vpop.f32.mrb[0].mxu0
        %v941 = vadd.f32 %v862, %v940
        %v942 = vpop.f32.mrb[0].mxu0
        %943 = vmatprep.mubr.bf16.mxu0 0
        %944 = vmatmul.mubr.bf16.gmra.mrb[0].mxu0 %v849
        %v945 = vpop.f32.mrb[0].mxu0
        %v946 = vadd.f32 %v862, %v945
        %v947 = vpop.f32.mrb[0].mxu0
        %v948 = vpop.f32.mrb[0].mxu0
        %v949 = vadd.f32 %v862, %v948
        %v950 = vpop.f32.mrb[0].mxu0
        %951 = vmatprep.mubr.bf16.mxu0 0
        %952 = vmatmul.mubr.bf16.gmra.mrb[0].mxu0 %v850
        %v953 = vpop.f32.mrb[0].mxu0
        %v954 = vadd.f32 %v862, %v953
        %v955 = vpop.f32.mrb[0].mxu0
        %v956 = vpop.f32.mrb[0].mxu0
        %v957 = vadd.f32 %v862, %v956
        %v958 = vpop.f32.mrb[0].mxu0
        %959 = vdwg.mxu0
        %v960 = vpack.c.bf16 %v495, %v492
        %v961 = vpack.c.bf16 %v503, %v500
        %v962 = vpack.c.bf16 %v511, %v508
        %v963 = vpack.c.bf16 %v519, %v516
        %v964 = vpack.c.bf16 %v901, %v898
        %v965 = vpack.c.bf16 %v909, %v906
        %v966 = vpack.c.bf16 %v917, %v914
        %v967 = vpack.c.bf16 %v925, %v922
        %v968 = vpack.c.bf16 %v933, %v930
        %v969 = vpack.c.bf16 %v941, %v938
        %v970 = vpack.c.bf16 %v949, %v946
        %v971 = vpack.c.bf16 %v957, %v954
        %972 = vmatprep.subr.bf16.mxu0 0
        %973 = vmatpush1.bf16.xpose.msra.mxu0 %v964
        %974 = vmatprep.subr.bf16.mxu0 0
        %975 = vmatpush1.bf16.xpose.msra.mxu0 %v965
        %976 = vmatprep.subr.bf16.mxu0 0
        %977 = vmatpush1.bf16.xpose.msra.mxu0 %v966
        %978 = vmatprep.subr.bf16.mxu0 0
        %979 = vmatpush1.bf16.xpose.msra.mxu0 %v967
        %980 = vmatprep.subr.bf16.mxu0 0
        %981 = vmatpush1.bf16.xpose.msra.mxu0 %v968
        %982 = vmatprep.subr.bf16.mxu0 0
        %983 = vmatpush1.bf16.xpose.msra.mxu0 %v969
        %984 = vmatprep.subr.bf16.mxu0 0
        %985 = vmatpush1.bf16.xpose.msra.mxu0 %v970
        %986 = vmatprep.subr.bf16.mxu0 0
        %987 = vmatpush1.bf16.xpose.msra.mxu0 %v971
        %988 = vmatprep.subr.bf16.mxu0 0
        %989 = vmatpush1.bf16.xpose.msra.mxu0 0
        %990 = vmatprep.subr.bf16.mxu0 0
        %991 = vmatpush1.bf16.xpose.msra.mxu0 0
        %992 = vmatprep.subr.bf16.mxu0 0
        %993 = vmatpush1.bf16.xpose.msra.mxu0 0
        %994 = vmatprep.subr.bf16.mxu0 0
        %995 = vmatpush1.bf16.xpose.msra.mxu0 0
        %996 = vmatprep.subr.bf16.mxu0 0
        %997 = vmatpush1.bf16.xpose.msra.mxu0 0
        %998 = vmatprep.subr.bf16.mxu0 0
        %999 = vmatpush1.bf16.xpose.msra.mxu0 0
        %1000 = vmatprep.subr.bf16.mxu0 0
        %1001 = vmatpush1.bf16.xpose.msra.mxu0 0
        %1002 = vmatprep.subr.bf16.mxu0 0
        %1003 = vmatpush1.bf16.xpose.msra.mxu0 0
        %1004 = vmatprep.mubr.bf16.mxu0 0
        %1005 = vmatmul.mubr.bf16.gmra.mrb[0].mxu0 %v960
        %v1006 = vpop.f32.mrb[0].mxu0
        %v1007 = vadd.f32 0.0, %v1006
        %v1008 = vpop.f32.mrb[0].mxu0
        %v1009 = vpop.f32.mrb[0].mxu0
        %v1010 = vadd.f32 0.0, %v1009
        %v1011 = vpop.f32.mrb[0].mxu0
        %1012 = vmatprep.mubr.bf16.mxu0 0
        %1013 = vmatmul.mubr.bf16.gmra.mrb[0].mxu0 %v961
        %v1014 = vpop.f32.mrb[0].mxu0
        %v1015 = vadd.f32 0.0, %v1014
        %v1016 = vpop.f32.mrb[0].mxu0
        %v1017 = vpop.f32.mrb[0].mxu0
        %v1018 = vadd.f32 0.0, %v1017
        %v1019 = vpop.f32.mrb[0].mxu0
        %1020 = vmatprep.mubr.bf16.mxu0 0
        %1021 = vmatmul.mubr.bf16.gmra.mrb[0].mxu0 %v962
        %v1022 = vpop.f32.mrb[0].mxu0
        %v1023 = vadd.f32 0.0, %v1022
        %v1024 = vpop.f32.mrb[0].mxu0
        %v1025 = vpop.f32.mrb[0].mxu0
        %v1026 = vadd.f32 0.0, %v1025
        %v1027 = vpop.f32.mrb[0].mxu0
        %1028 = vmatprep.mubr.bf16.mxu0 0
        %1029 = vmatmul.mubr.bf16.gmra.mrb[0].mxu0 %v963
        %v1030 = vpop.f32.mrb[0].mxu0
        %v1031 = vadd.f32 0.0, %v1030
        %v1032 = vpop.f32.mrb[0].mxu0
        %v1033 = vpop.f32.mrb[0].mxu0
        %v1034 = vadd.f32 0.0, %v1033
        %v1035 = vpop.f32.mrb[0].mxu0
        %1036 = vdwg.mxu0
        %1037 = vst [vmem:[%s221] sm:$0xff] %v1007
        %1038 = vst [vmem:[%s221 + $0x8] sm:$0xff] %v1010
        %1039 = vst [vmem:[%s221 + $0x10] sm:$0xff] %v1015
        %1040 = vst [vmem:[%s221 + $0x18] sm:$0xff] %v1018
        %1041 = vst [vmem:[%s221 + $0x20] sm:$0xff] %v1023
        %1042 = vst [vmem:[%s221 + $0x28] sm:$0xff] %v1026
        %1043 = vst [vmem:[%s221 + $0x30] sm:$0xff] %v1031
        %1044 = vst [vmem:[%s221 + $0x38] sm:$0xff] %v1034
        %s1045 = sand.u32 %s134, 1
        %s1046 = scalar_lea.sflag [#allocation3], %s1045
        %s1047 = sand.u32 %s134, 1
        %s1048 = smul.addr %s1047, 64
        %s1049 = scalar_lea.vmem [#allocation2], %s1048
        // Predicated region
        $region37: #{tpu_custom_call.1} parent=35 // pred_check
          %p1050 = pneg %p144
        $region38: #{tpu_custom_call.1} parent=35 // pred_check_branch
          %1052 = sbr.rel (%p1050) target = $region40
        $region39: #{tpu_custom_call.1} parent=35 // pred_region
          %s1053 = smul.u32 8, %s22
          %s1055 = ssub.s32 1024, 1024
          %1056 = vsyncadd %s1046, %s1055
          %s1057 = smul.addr %s1053, 3
          %s1058 = sadd.s32 %s23, %s1057
          %s1059 = smul.addr %s1058, 128
          %s1060 = scalar_lea.hbm %s4, %s1059
          %s1061 = sshll.u32 %s1049, 4
          %s1062 = int_to_ptr.vmem [resolvable:$true] %s1061
          %1067 = dma.vmem_to_hbm [thread:$0]  %s1062, 1024, %s1060, %s1046, 128, 384, 8
        $region40: #{tpu_custom_call.1} parent=35 // pred_fallthru
          _
      $region36: #{tpu_custom_call.1} parent=5 // pred_fallthru
        _
      %p1068 = scmp.le.s32.totalorder 2, %s13
      // Predicated region
      $region41: #{tpu_custom_call.1} parent=5 // pred_check
        %p1069 = pneg %p1068
      $region42: #{tpu_custom_call.1} parent=5 // pred_check_branch
        %1071 = sbr.rel (%p1069) target = $region44
      $region43: #{tpu_custom_call.1} parent=5 // pred_region
        %s1072 = ssub.s32 %s13, 2
        // Predicated region
        $region45: #{tpu_custom_call.1} parent=43 // pred_check
          %p1073 = pneg %p150
        $region46: #{tpu_custom_call.1} parent=43 // pred_check_branch
          %1075 = sbr.rel (%p1073) target = $region48
        $region47: #{tpu_custom_call.1} parent=43 // pred_region
          %s1076 = sand.u32 %s135, 1
          %s1077 = scalar_lea.sflag [#allocation3], %s1076
          %s1078 = sand.u32 %s135, 1
          %s1079 = smul.addr %s1078, 64
          %s1080 = scalar_lea.vmem [#allocation2], %s1079
          %1081 = dma.done %s1077, 1024
        $region48: #{tpu_custom_call.1} parent=43 // pred_fallthru
          _
      $region44: #{tpu_custom_call.1} parent=5 // pred_fallthru
        _
    $region6: #{tpu_custom_call.1} parent=1 // loop_footer
      %s17 = sadd.s32 1, %s13
    $region7: #{tpu_custom_call.1} parent=1 // loop_footer_branch
      %12 = sbr.rel target = $region3
    $region8: #{tpu_custom_call.1} parent=1 // loop_exit
      _
    %1082 = vsyncpa [#allocation3], 1
    %s1083 = scalar_lea.sflag [#allocation3], 1
    %1084 = vsyncpa %s1083, 1

</llo_original>
